<compile_context>
chip_gen: v5e
topology: v5e:2x2
jax: 0.10.0
libtpu: 0.0.40
codegen_flags: <defaults>
</compile_context>

<pallas_src>
import jax
import jax.numpy as jnp
from jax.experimental import pallas as pl
from jax.experimental.pallas import tpu as pltpu


# --------------------------------------------------------------------------- #
# SCSE Pallas kernel
# --------------------------------------------------------------------------- #
def _scse_kernel(x_ref, cgate_ref, ws_ref, bs_ref, o_ref):
    # x_ref block: (1, C, T) -- channels on sublanes, pixels on lanes.
    x = x_ref[0]                                     # (C, T), native dtype
    xf = x.astype(jnp.float32)

    # sSE branch: 1x1 conv (C -> 1) == per-channel scale + sublane reduce.
    # Pure VPU + XLU work; no MXU involvement.
    s = jnp.sum(xf * ws_ref[...], axis=0, keepdims=True) + bs_ref[0]   # (1, T)
    s_gate = jax.nn.sigmoid(s)                       # (1, T), broadcast over channels

    # cSE gate was precomputed per sample in the wrapper (hoisted squeeze MLP).
    gate = cgate_ref[0] + s_gate                     # (C, 1) + (1, T) -> (C, T)

    # out = x * (c_gate + s_gate): single multiply per element.
    o_ref[0] = (x * gate.astype(x.dtype)).astype(o_ref.dtype)


def _pick_hw_tile(C, HW, itemsize):
    """Largest lane-dense (multiple-of-128) divisor of HW whose double-buffered
    input+output blocks stay within a conservative ~16 MiB budget (v7x-safe)."""
    if HW % 128 != 0:
        return HW                          # full-extent block (always legal)
    budget = 16 * 1024 * 1024              # ~ in + out, double buffered
    cap = budget // (4 * max(C, 1) * itemsize)
    cap = max(128, min(cap, 4096))
    cap = (cap // 128) * 128
    best = 128
    t = 256
    while t <= min(HW, cap):
        if HW % t == 0:
            best = t
        t += 128
    return best


def scse_pallas(x_nchw, w1, b1, w2, b2, ws, bs):
    """SCSEModule forward.  x_nchw: (N, C, H, W).  w1: (Cr, C), b1: (Cr,),
    w2: (C, Cr), b2: (C,), ws: (1, C), bs: (1,).  Returns (N, C, H, W)."""
    N, C, H, W = x_nchw.shape
    HW = H * W
    x = x_nchw.reshape(N, C, HW)           # NCHW consumed directly; reshape is free.

    # ---- cSE gate: hoisted out of the per-pixel kernel (tiny (N, C) computation).
    mean = jnp.mean(x.astype(jnp.float32), axis=2)                    # (N, C)
    z1 = jnp.maximum(mean @ w1.astype(jnp.float32).T + b1, 0.0)       # (N, Cr)
    c_gate = jax.nn.sigmoid(z1 @ w2.astype(jnp.float32).T + b2)       # (N, C)
    c_gate = c_gate.reshape(N, C, 1).astype(jnp.float32)

    ws_col = ws.reshape(C, 1).astype(jnp.float32)                     # (C, 1) in VMEM
    bs_smem = bs.reshape(1).astype(jnp.float32)                       # scalar in SMEM

    T = _pick_hw_tile(C, HW, x.dtype.itemsize)
    grid = (N, HW // T)

    out = pl.pallas_call(
        _scse_kernel,
        out_shape=jax.ShapeDtypeStruct((N, C, HW), x.dtype),
        grid_spec=pltpu.PrefetchScalarGridSpec(
            num_scalar_prefetch=0,
            grid=grid,
            in_specs=[
                pl.BlockSpec((1, C, T), lambda n, t: (n, 0, t)),      # x tile
                pl.BlockSpec((1, C, 1), lambda n, t: (n, 0, 0)),      # per-sample cSE gate
                pl.BlockSpec((C, 1), lambda n, t: (0, 0)),            # sSE weight column
                pl.BlockSpec(memory_space=pltpu.MemorySpace.SMEM),    # sSE bias scalar
            ],
            out_specs=pl.BlockSpec((1, C, T), lambda n, t: (n, 0, t)),
        ),
        compiler_params=pltpu.CompilerParams(
            dimension_semantics=("parallel", "parallel"),
            vmem_limit_bytes=32 * 1024 * 1024,
        ),
    )(x, c_gate, ws_col, bs_smem)

    return out.reshape(N, C, H, W)


def scse_reference(x, w1, b1, w2, b2, ws, bs):
    """Pure-JAX NCHW reference mirroring the PyTorch SCSEModule."""
    mean = jnp.mean(x, axis=(2, 3), keepdims=True)                    # (N, C, 1, 1)
    z1 = jnp.einsum('ncij,rc->nrij', mean, w1) + b1[None, :, None, None]
    z1 = jnp.maximum(z1, 0.0)
    z2 = jnp.einsum('nrij,cr->ncij', z1, w2) + b2[None, :, None, None]
    c_gate = jax.nn.sigmoid(z2)                                       # (N, C, 1, 1)
    s = jnp.einsum('nchw,oc->nohw', x, ws) + bs[None, :, None, None]  # (N, 1, H, W)
    s_gate = jax.nn.sigmoid(s)
    return x * c_gate + x * s_gate


# --------------------------------------------------------------------------- #
# UnetDecoder forward (eval mode) built around the Pallas SCSE kernel
# --------------------------------------------------------------------------- #
def init_scse_params(key, C, reduction=16):
    Cr = max(C // reduction, 1)
    k = jax.random.split(key, 6)
    return dict(
        w1=jax.random.normal(k[0], (Cr, C), jnp.float32) * 0.1,
        b1=jax.random.normal(k[1], (Cr,), jnp.float32) * 0.1,
        w2=jax.random.normal(k[2], (C, Cr), jnp.float32) * 0.1,
        b2=jax.random.normal(k[3], (C,), jnp.float32) * 0.1,
        ws=jax.random.normal(k[4], (1, C), jnp.float32) * 0.1,
        bs=jax.random.normal(k[5], (1,), jnp.float32) * 0.1,
    )


def scse_apply(p, x, use_pallas=True):
    fn = scse_pallas if use_pallas else scse_reference
    return fn(x, p['w1'], p['b1'], p['w2'], p['b2'], p['ws'], p['bs'])


def init_conv_bn(key, cin, cout):
    k = jax.random.split(key, 4)
    return dict(
        w=jax.random.normal(k[0], (cout, cin, 3, 3), jnp.float32) * 0.05,
        gamma=1.0 + 0.1 * jax.random.normal(k[1], (cout,), jnp.float32),
        beta=0.1 * jax.random.normal(k[2], (cout,), jnp.float32),
        mean=0.1 * jax.random.normal(k[3], (cout,), jnp.float32),
        var=jnp.ones((cout,), jnp.float32),
    )


def conv_bn_relu(x, p, eps=1e-5):
    # Dropout2d is identity in eval mode.  Conv -> BN(eval) -> ReLU.
    y = jax.lax.conv_general_dilated(
        x, p['w'], window_strides=(1, 1), padding='SAME',
        dimension_numbers=('NCHW', 'OIHW', 'NCHW'))
    scale = p['gamma'] / jnp.sqrt(p['var'] + eps)
    shift = p['beta'] - p['mean'] * scale
    y = y * scale[None, :, None, None] + shift[None, :, None, None]
    return jnp.maximum(y, 0.0)


def upsample2x_nearest(x):
    return jnp.repeat(jnp.repeat(x, 2, axis=2), 2, axis=3)


def init_decoder_block(key, in_ch, skip_ch, out_ch):
    k = jax.random.split(key, 4)
    p = dict(
        conv1=init_conv_bn(k[0], in_ch + skip_ch, out_ch),
        conv2=init_conv_bn(k[1], out_ch, out_ch),
        att2=init_scse_params(k[2], out_ch),
    )
    if skip_ch > 0:
        p['att1'] = init_scse_params(k[3], in_ch + skip_ch)
    return p


def decoder_block_apply(p, x, skip, use_pallas=True):
    x = upsample2x_nearest(x)
    if skip is not None:
        x = jnp.concatenate([x, skip], axis=1)
        x = scse_apply(p['att1'], x, use_pallas)
    x = conv_bn_relu(x, p['conv1'])
    x = conv_bn_relu(x, p['conv2'])
    x = scse_apply(p['att2'], x, use_pallas)
    return x


def init_unet_decoder(key, encoder_channels, decoder_channels):
    enc = encoder_channels[::-1]
    head = enc[0]
    in_chs = [head] + list(decoder_channels[:-1])
    skip_chs = (list(enc[1:]) + [0])[:len(decoder_channels)]
    keys = jax.random.split(key, len(decoder_channels))
    return [init_decoder_block(k, i, s, o)
            for k, i, s, o in zip(keys, in_chs, skip_chs, decoder_channels)]


def unet_decoder_apply(blocks, features, use_pallas=True):
    feats = features[::-1]
    x = feats[0]                    # center = Identity
    skips = feats[1:]
    for i, bp in enumerate(blocks):
        skip = skips[i] if i < len(skips) else None
        x = decoder_block_apply(bp, x, skip, use_pallas)
    return x


# --------------------------------------------------------------------------- #
if __name__ == "__main__":
    key = jax.random.PRNGKey(0)
    k_x, k_scse, k_f0, k_f1, k_f2, k_dec = jax.random.split(key, 6)

    # ---- 1) standalone SCSE kernel check ----------------------------------
    N, C, H, W = 2, 32, 16, 16
    x = jax.random.normal(k_x, (N, C, H, W), dtype=jnp.float32)
    sp = init_scse_params(k_scse, C, reduction=16)

    out = jax.block_until_ready(scse_apply(sp, x, use_pallas=True))
    ref = scse_apply(sp, x, use_pallas=False)
    assert out.shape == (N, C, H, W)
    assert jnp.allclose(out, ref, rtol=1e-3, atol=1e-3), "SCSE mismatch vs reference"

    # ---- 2) full UnetDecoder forward (SCSE via Pallas, rest via XLA) ------
    encoder_channels = (16, 16, 32)     # shallow -> deep, as given to UnetDecoder
    decoder_channels = (32, 16)
    blocks = init_unet_decoder(k_dec, encoder_channels, decoder_channels)

    f0 = jax.random.normal(k_f0, (2, 16, 16, 16), dtype=jnp.float32)  # shallowest
    f1 = jax.random.normal(k_f1, (2, 16, 8, 8), dtype=jnp.float32)
    f2 = jax.random.normal(k_f2, (2, 32, 4, 4), dtype=jnp.float32)    # head (deepest)
    features = [f0, f1, f2]

    y_pallas = jax.block_until_ready(unet_decoder_apply(blocks, features, use_pallas=True))
    y_ref = unet_decoder_apply(blocks, features, use_pallas=False)
    assert y_pallas.shape == (2, 16, 16, 16)
    assert jnp.allclose(y_pallas, y_ref, rtol=1e-3, atol=1e-3), "UnetDecoder mismatch"

    print("KERNEL_OK")
</pallas_src>

<mosaic_0001>
module attributes {stable_mosaic.version = 11 : i64} {
  func.func @_scse_kernel(%arg0: i32, %arg1: i32, %arg2: memref<1x32x256xf32, #tpu.memory_space<vmem>>, %arg3: memref<1x32x1xf32, #tpu.memory_space<vmem>>, %arg4: memref<32x1xf32, #tpu.memory_space<vmem>>, %arg5: memref<1xf32, #tpu.memory_space<smem>>, %arg6: memref<1x32x256xf32, #tpu.memory_space<vmem>>) attributes {dimension_semantics = [#tpu.dimension_semantics<parallel>, #tpu.dimension_semantics<parallel>], iteration_bounds = array<i64: 2, 1>, scalar_prefetch = 0 : i64, scratch_operands = 0 : i64, tpu.core_type = #tpu.core_type<tc>, window_params = [{transform_indices = @transform_0, window_bounds = array<i64: 1, 32, 256>}, {transform_indices = @transform_1, window_bounds = array<i64: 1, 32, 1>}, {pipeline_mode = #tpu.pipeline_mode<synchronous>, transform_indices = @transform_2, window_bounds = array<i64: 32, 1>}, {transform_indices = @transform_3, window_bounds = array<i64: 1>}, {transform_indices = @transform_4, window_bounds = array<i64: 1, 32, 256>}]} {
    %c0 = arith.constant 0 : index
    %c0_0 = arith.constant 0 : index
    %c0_1 = arith.constant 0 : index
    %0 = vector.load %arg2[%c0, %c0_0, %c0_1] : memref<1x32x256xf32, #tpu.memory_space<vmem>>, vector<1x32x256xf32>
    %1 = vector.shape_cast %0 : vector<1x32x256xf32> to vector<32x256xf32>
    %c0_2 = arith.constant 0 : index
    %c0_3 = arith.constant 0 : index
    %2 = vector.load %arg4[%c0_2, %c0_3] : memref<32x1xf32, #tpu.memory_space<vmem>>, vector<32x1xf32>
    %3 = vector.broadcast %2 : vector<32x1xf32> to vector<32x256xf32>
    %4 = arith.mulf %1, %3 : vector<32x256xf32>
    %cst = arith.constant dense<0.000000e+00> : vector<256xf32>
    %5 = vector.multi_reduction <add>, %4, %cst [0] : vector<32x256xf32> to vector<256xf32>
    %6 = vector.shape_cast %5 : vector<256xf32> to vector<1x256xf32>
    %c0_4 = arith.constant 0 : index
    %7 = memref.load %arg5[%c0_4] : memref<1xf32, #tpu.memory_space<smem>>
    %8 = vector.broadcast %7 : f32 to vector<1x256xf32>
    %9 = arith.addf %6, %8 : vector<1x256xf32>
    %10 = arith.negf %9 : vector<1x256xf32>
    %11 = math.exp %10 : vector<1x256xf32>
    %cst_5 = arith.constant 1.000000e+00 : f32
    %12 = vector.broadcast %cst_5 : f32 to vector<1x256xf32>
    %13 = arith.addf %12, %11 : vector<1x256xf32>
    %14 = arith.divf %12, %13 : vector<1x256xf32>
    %c0_6 = arith.constant 0 : index
    %c0_7 = arith.constant 0 : index
    %c0_8 = arith.constant 0 : index
    %15 = vector.load %arg3[%c0_6, %c0_7, %c0_8] : memref<1x32x1xf32, #tpu.memory_space<vmem>>, vector<1x32x1xf32>
    %16 = vector.shape_cast %15 : vector<1x32x1xf32> to vector<32x1xf32>
    %17 = vector.broadcast %16 : vector<32x1xf32> to vector<32x256xf32>
    %18 = vector.broadcast %14 : vector<1x256xf32> to vector<32x256xf32>
    %19 = arith.addf %17, %18 : vector<32x256xf32>
    %20 = arith.mulf %1, %19 : vector<32x256xf32>
    %c0_9 = arith.constant 0 : index
    %c0_10 = arith.constant 0 : index
    %c0_11 = arith.constant 0 : index
    %21 = vector.load %arg6[%c0_9, %c0_10, %c0_11] : memref<1x32x256xf32, #tpu.memory_space<vmem>>, vector<1x32x256xf32>
    %22 = vector.shape_cast %21 : vector<1x32x256xf32> to vector<32x256xf32>
    %23 = vector.shape_cast %20 : vector<32x256xf32> to vector<1x32x256xf32>
    tpu.vector_store %arg6[%c0_9, %c0_10, %c0_11], %23 {strides = array<i32>} : memref<1x32x256xf32, #tpu.memory_space<vmem>>, vector<1x32x256xf32>,
    return
  }
  func.func @transform_0(%arg0: i32, %arg1: i32) -> (i32, i32, i32) {
    %c0_i32 = arith.constant 0 : i32
    %c0_i32_0 = arith.constant 0 : i32
    return %arg0, %c0_i32, %arg1 : i32, i32, i32
  }
  func.func @transform_1(%arg0: i32, %arg1: i32) -> (i32, i32, i32) {
    %c0_i32 = arith.constant 0 : i32
    %c0_i32_0 = arith.constant 0 : i32
    %c0_i32_1 = arith.constant 0 : i32
    return %arg0, %c0_i32, %c0_i32_0 : i32, i32, i32
  }
  func.func @transform_2(%arg0: i32, %arg1: i32) -> (i32, i32) {
    %c0_i32 = arith.constant 0 : i32
    %c0_i32_0 = arith.constant 0 : i32
    %c0_i32_1 = arith.constant 0 : i32
    return %c0_i32, %c0_i32_0 : i32, i32
  }
  func.func @transform_3(%arg0: i32, %arg1: i32) -> i32 {
    %c0_i32 = arith.constant 0 : i32
    %c0_i32_0 = arith.constant 0 : i32
    return %c0_i32 : i32
  }
  func.func @transform_4(%arg0: i32, %arg1: i32) -> (i32, i32, i32) {
    %c0_i32 = arith.constant 0 : i32
    %c0_i32_0 = arith.constant 0 : i32
    return %arg0, %c0_i32, %arg1 : i32, i32, i32
  }
}

</mosaic_0001>

<llo_original>
// kernel: tpu_custom_call.1
$region0: #{tpu_custom_call.1}
  #allocation0 [shape = 'u32[]', space=smem, size = 0x4, offset = 0x4, fixed_abs, tag = 'smem constant byte address 0x4 - core index']
  #allocation1 [shape = 'u32[72,128]{1,0:T(1,128)}', space=vmem, size = 0x9000, scoped, tag = 'internal scratch']
  #allocation2 [shape = 'f32[1]{0:T(128)S(6)}', space=smem, size = 0x200, scoped, tag = 'scoped memory for tpu_custom_call.1']
  %s0 = inlined_call_operand.hbm [shape: f32[2,32,256], index: 0, kind: input, shape index: {}]
  %s1 = inlined_call_operand.vmem [shape: f32[2,32,1], index: 1, kind: input, shape index: {}]
  %s2 = inlined_call_operand.vmem [shape: f32[32,1], index: 2, kind: input, shape index: {}]
  %s3 = inlined_call_operand.<no memory space> [shape: f32[1], index: 3, kind: input, shape index: {}]
  %s4 = inlined_call_operand.hbm [shape: f32[2,32,256], index: 4, kind: output, shape index: {}]
  %s5 = sld [smem:[#allocation0]]
  $region53: #{tpu_custom_call.1} parent=0
    _
  %s7 = ssub.s32 1, %s5
  %s8 = scalar_select 0, %s7, %s5
  %9 = sst [smem:[#allocation2]] %s3
  $region1: #{tpu_custom_call.1} parent=0
    #allocation3 [shape = 'u8[65536]{0}', space=vmem, size = 0x10000, scoped, tag = 'input window, operand 0']
    #allocation4 [shape = 's32[2]{0}', space=sflag, size = 0x8, scoped, tag = 'scoped memory for tpu_custom_call.1']
    #allocation5 [shape = 's32[2]{0}', space=sflag, size = 0x8, scoped, tag = 'scoped memory for tpu_custom_call.1']
    #allocation6 [shape = 'u8[65536]{0}', space=vmem, size = 0x10000, scoped, tag = 'output window, operand 0']
    %10 = vsyncpa [#allocation4], 0
    %s11 = scalar_lea.sflag [#allocation4], 1
    %12 = vsyncpa %s11, 0
    %13 = vsyncpa [#allocation5], 0
    %s14 = scalar_lea.sflag [#allocation5], 1
    %15 = vsyncpa %s14, 0
    loop: start=0, step=1, limit=4
    $region2: #{tpu_custom_call.1} parent=1 // loop_pre_header
      _
    $region3: #{tpu_custom_call.1} parent=1 // loop_header
      %s17 = sphi 0, %s21
      %p18 = scmp.ge.s32.totalorder %s17, 4
      %s24 = sphi 0, %s36
      %s25 = sphi 0, %s32
      %s26 = sphi 0, %s24
      %s27 = sphi 0, %s25
      %s28 = sphi 0, %s26
      %s29 = sphi 0, %s27
      %s41 = sphi 0, %s43
      %s44 = sphi 0, %s41
      %s45 = sphi 0, %s44
      %s61 = sphi 0, %s45
      %s67 = sphi 0, %s69
      %s70 = sphi 0, %s67
      %s71 = sphi 0, %s70
      %s87 = sphi 0, %s71
      %s91 = sphi 0, %s91
      %s93 = sphi 0, %s91
      %s94 = sphi 0, %s93
      %s108 = sphi 0, %s94
      %s112 = sphi 0, %s112
      %s114 = sphi 0, %s112
      %s115 = sphi 0, %s114
      %s129 = sphi 0, %s115
      %s137 = sphi 0, %s139
      %s140 = sphi 0, %s137
      %s141 = sphi 0, %s140
      %s157 = sphi 0, %s141
    $region4: #{tpu_custom_call.1} parent=1 // loop_header_branch
      %20 = sbr.rel (%p18) target = $region8
    $region5: #{tpu_custom_call.1} parent=1 // loop_body
      %s22 = ssub.s32 %s17, 1
      %s23 = ssub.s32 %s17, 2
      %s30 = sadd.s32 1, %s25
      %p31 = scmp.ge.s32.totalorder %s30, 1
      %s32 = scalar_select %p31, 0, %s30
      %s33 = sadd.s32 1, %s24
      %s34 = scalar_select %p31, %s33, %s24
      %p35 = scmp.ge.s32.totalorder %s34, 2
      %s36 = scalar_select %p35, 0, %s34
      %s37 = ssub.s32 %s24, %s36
      %s38 = ssub.s32 %s25, %s32
      %s39 = sor.u32 %s37, %s38
      %p40 = scmp.eq.s32.totalorder %s39, 0
      %s42 = sadd.s32 %s41, 1
      %s43 = scalar_select %p40, %s41, %s42
      %p46 = pneg %p40
      %p47 = scmp.eq.s32.totalorder %s17, 1
      %p48 = por %p46, %p47
      %p49 = scmp.ne.s32.totalorder %s41, %s44
      %p50 = scmp.eq.s32.totalorder %s17, 0
      %p51 = por %p49, %p50
      %p52 = scmp.ne.s32.totalorder %s41, %s44
      %p53 = scmp.eq.s32.totalorder %s22, 1
      %p54 = por %p52, %p53
      %p55 = scmp.ne.s32.totalorder %s44, %s45
      %p56 = scmp.eq.s32.totalorder %s22, 0
      %p57 = por %p55, %p56
      %p58 = scmp.ne.s32.totalorder %s44, %s45
      %p59 = scmp.eq.s32.totalorder %s23, 1
      %p60 = por %p58, %p59
      %p62 = scmp.ne.s32.totalorder %s45, %s61
      %p63 = scmp.eq.s32.totalorder %s23, 0
      %p64 = por %p62, %p63
      %s65 = ssub.s32 %s24, %s36
      %p66 = scmp.eq.s32.totalorder %s65, 0
      %s68 = sadd.s32 %s67, 1
      %s69 = scalar_select %p66, %s67, %s68
      %p72 = pneg %p66
      %p73 = scmp.eq.s32.totalorder %s17, 1
      %p74 = por %p72, %p73
      %p75 = scmp.ne.s32.totalorder %s67, %s70
      %p76 = scmp.eq.s32.totalorder %s17, 0
      %p77 = por %p75, %p76
      %p78 = scmp.ne.s32.totalorder %s67, %s70
      %p79 = scmp.eq.s32.totalorder %s22, 1
      %p80 = por %p78, %p79
      %p81 = scmp.ne.s32.totalorder %s70, %s71
      %p82 = scmp.eq.s32.totalorder %s22, 0
      %p83 = por %p81, %p82
      %p84 = scmp.ne.s32.totalorder %s70, %s71
      %p85 = scmp.eq.s32.totalorder %s23, 1
      %p86 = por %p84, %p85
      %p88 = scmp.ne.s32.totalorder %s71, %s87
      %p89 = scmp.eq.s32.totalorder %s23, 0
      %p90 = por %p88, %p89
      %s92 = sadd.s32 %s91, 1
      %p95 = scmp.eq.s32.totalorder %s17, 1
      %p96 = scmp.ne.s32.totalorder %s91, %s93
      %p97 = scmp.eq.s32.totalorder %s17, 0
      %p98 = por %p96, %p97
      %p99 = scmp.ne.s32.totalorder %s91, %s93
      %p100 = scmp.eq.s32.totalorder %s22, 1
      %p101 = por %p99, %p100
      %p102 = scmp.ne.s32.totalorder %s93, %s94
      %p103 = scmp.eq.s32.totalorder %s22, 0
      %p104 = por %p102, %p103
      %p105 = scmp.ne.s32.totalorder %s93, %s94
      %p106 = scmp.eq.s32.totalorder %s23, 1
      %p107 = por %p105, %p106
      %p109 = scmp.ne.s32.totalorder %s94, %s108
      %p110 = scmp.eq.s32.totalorder %s23, 0
      %p111 = por %p109, %p110
      %s113 = sadd.s32 %s112, 1
      %p116 = scmp.eq.s32.totalorder %s17, 1
      %p117 = scmp.ne.s32.totalorder %s112, %s114
      %p118 = scmp.eq.s32.totalorder %s17, 0
      %p119 = por %p117, %p118
      %p120 = scmp.ne.s32.totalorder %s112, %s114
      %p121 = scmp.eq.s32.totalorder %s22, 1
      %p122 = por %p120, %p121
      %p123 = scmp.ne.s32.totalorder %s114, %s115
      %p124 = scmp.eq.s32.totalorder %s22, 0
      %p125 = por %p123, %p124
      %p126 = scmp.ne.s32.totalorder %s114, %s115
      %p127 = scmp.eq.s32.totalorder %s23, 1
      %p128 = por %p126, %p127
      %p130 = scmp.ne.s32.totalorder %s115, %s129
      %p131 = scmp.eq.s32.totalorder %s23, 0
      %p132 = por %p130, %p131
      %s133 = ssub.s32 %s24, %s36
      %s134 = ssub.s32 %s25, %s32
      %s135 = sor.u32 %s133, %s134
      %p136 = scmp.eq.s32.totalorder %s135, 0
      %s138 = sadd.s32 %s137, 1
      %s139 = scalar_select %p136, %s137, %s138
      %p142 = pneg %p136
      %p143 = scmp.eq.s32.totalorder %s17, 1
      %p144 = por %p142, %p143
      %p145 = scmp.ne.s32.totalorder %s137, %s140
      %p146 = scmp.eq.s32.totalorder %s17, 0
      %p147 = por %p145, %p146
      %p148 = scmp.ne.s32.totalorder %s137, %s140
      %p149 = scmp.eq.s32.totalorder %s22, 1
      %p150 = por %p148, %p149
      %p151 = scmp.ne.s32.totalorder %s140, %s141
      %p152 = scmp.eq.s32.totalorder %s22, 0
      %p153 = por %p151, %p152
      %p154 = scmp.ne.s32.totalorder %s140, %s141
      %p155 = scmp.eq.s32.totalorder %s23, 1
      %p156 = por %p154, %p155
      %p158 = scmp.ne.s32.totalorder %s141, %s157
      %p159 = scmp.eq.s32.totalorder %s23, 0
      %p160 = por %p158, %p159
      %p161 = scmp.le.s32.totalorder 1, %s17
      %p162 = scmp.lt.s32.totalorder %s17, 3
      %p163 = pnand %p161, %p162
      %p164 = pneg %p163
      // Predicated region
      $region9: #{tpu_custom_call.1} parent=5 // pred_check
        _
      $region10: #{tpu_custom_call.1} parent=5 // pred_check_branch
        %166 = sbr.rel (%p163) target = $region12
      $region11: #{tpu_custom_call.1} parent=5 // pred_region
        %s167 = ssub.s32 %s17, 1
        // Predicated region
        $region13: #{tpu_custom_call.1} parent=11 // pred_check
          %p168 = pneg %p104
        $region14: #{tpu_custom_call.1} parent=11 // pred_check_branch
          %170 = sbr.rel (%p168) target = $region16
        $region15: #{tpu_custom_call.1} parent=11 // pred_region
          _
        $region16: #{tpu_custom_call.1} parent=11 // pred_fallthru
          _
        // Predicated region
        $region17: #{tpu_custom_call.1} parent=11 // pred_check
          %p171 = pneg %p125
        $region18: #{tpu_custom_call.1} parent=11 // pred_check_branch
          %173 = sbr.rel (%p171) target = $region20
        $region19: #{tpu_custom_call.1} parent=11 // pred_region
          _
        $region20: #{tpu_custom_call.1} parent=11 // pred_fallthru
          _
      $region12: #{tpu_custom_call.1} parent=5 // pred_fallthru
        _
      %p174 = scmp.lt.s32.totalorder %s17, 2
      // Predicated region
      $region21: #{tpu_custom_call.1} parent=5 // pred_check
        %p175 = pneg %p174
      $region22: #{tpu_custom_call.1} parent=5 // pred_check_branch
        %177 = sbr.rel (%p175) target = $region24
      $region23: #{tpu_custom_call.1} parent=5 // pred_region
        // Predicated region
        $region25: #{tpu_custom_call.1} parent=23 // pred_check
          %p178 = pneg %p51
        $region26: #{tpu_custom_call.1} parent=23 // pred_check_branch
          %180 = sbr.rel (%p178) target = $region28
        $region27: #{tpu_custom_call.1} parent=23 // pred_region
          %s181 = sand.u32 %s41, 1
          %s182 = scalar_lea.sflag [#allocation4], %s181
          %s183 = sand.u32 %s41, 1
          %s184 = smul.addr %s183, 64
          %s185 = scalar_lea.vmem [#allocation3], %s184
          %s186 = smul.u32 2, %s25
          %188 = vsyncadd %s182, 0
          %s189 = smul.addr %s24, 8
          %s190 = sadd.s32 %s186, %s189
          %s191 = smul.addr %s190, 8
          %s192 = scalar_lea.hbm %s0, %s191
          %s193 = sshll.u32 %s192, 4
          %s194 = int_to_ptr.hbm [resolvable:$true] %s193
          %s195 = sshll.u32 %s185, 4
          %s196 = int_to_ptr.vmem [resolvable:$true] %s195
          %201 = dma.hbm_to_vmem [thread:$0]  %s194, 1024, %s196, %s182, 256, 256, 16
        $region28: #{tpu_custom_call.1} parent=23 // pred_fallthru
          _
        // Predicated region
        $region29: #{tpu_custom_call.1} parent=23 // pred_check
          %p202 = pneg %p77
        $region30: #{tpu_custom_call.1} parent=23 // pred_check_branch
          %204 = sbr.rel (%p202) target = $region32
        $region31: #{tpu_custom_call.1} parent=23 // pred_region
          %p205 = scmp.lt.s32.totalorder %s24, 1
          %s206 = scalar_select %p205, %s24, 1
          %s207 = smul.addr %s206, 4
          %s208 = smul.addr %s207, 8
          %s209 = scalar_lea.vmem %s1, %s208
        $region32: #{tpu_custom_call.1} parent=23 // pred_fallthru
          _
      $region24: #{tpu_custom_call.1} parent=5 // pred_fallthru
        _
      %p210 = scmp.le.s32.totalorder 1, %s17
      %p211 = scmp.lt.s32.totalorder %s17, 3
      %p212 = pnand %p210, %p211
      %p213 = pneg %p212
      // Predicated region
      $region33: #{tpu_custom_call.1} parent=5 // pred_check
        _
      $region34: #{tpu_custom_call.1} parent=5 // pred_check_branch
        %215 = sbr.rel (%p212) target = $region36
      $region35: #{tpu_custom_call.1} parent=5 // pred_region
        %s216 = ssub.s32 %s17, 1
        %s217 = sand.u32 %s44, 1
        %s218 = scalar_lea.sflag [#allocation4], %s217
        %s219 = sand.u32 %s44, 1
        %s220 = smul.addr %s219, 64
        %s221 = scalar_lea.vmem [#allocation3], %s220
        // Predicated region
        $region37: #{tpu_custom_call.1} parent=35 // pred_check
          %p222 = pneg %p57
        $region38: #{tpu_custom_call.1} parent=35 // pred_check_branch
          %224 = sbr.rel (%p222) target = $region40
        $region39: #{tpu_custom_call.1} parent=35 // pred_region
          %226 = dma.done %s218, 1024
        $region40: #{tpu_custom_call.1} parent=35 // pred_fallthru
          _
        %s227 = sand.u32 %s44, 1
        %s228 = scalar_lea.sflag [#allocation4], %s227
        %s229 = sand.u32 %s44, 1
        %s230 = smul.addr %s229, 64
        %s231 = scalar_lea.vmem [#allocation3], %s230
        %p232 = pneg %p57
        %p233 = pneg %p54
        %p234 = scmp.lt.s32.totalorder %s26, 1
        %s235 = scalar_select %p234, %s26, 1
        %s236 = smul.addr %s235, 4
        %s237 = smul.addr %s236, 8
        %s238 = scalar_lea.vmem %s1, %s237
        %p239 = pneg %p83
        %p240 = pneg %p80
        %p241 = pneg %p104
        %p242 = pneg %p101
        %p243 = pneg %p125
        %p244 = pneg %p122
        %p245 = pneg %p153
        %p246 = pneg %p150
        %s247 = sand.u32 %s140, 1
        %s248 = scalar_lea.sflag [#allocation5], %s247
        %s249 = sand.u32 %s140, 1
        %s250 = smul.addr %s249, 64
        %s251 = scalar_lea.vmem [#allocation6], %s250
        %s252 = smul.u32 2, %s27
        %p253 = scmp.lt.s32.totalorder %s26, 1
        %s254 = scalar_select %p253, %s26, 1
        %s255 = smul.addr %s254, 4
        %s256 = smul.addr %s255, 8
        %s257 = scalar_lea.vmem %s1, %s256
        %s258 = smul.u32 2, %s27
        %v259 = vld [vmem:[%s221] sm:$0xff]
        %v260 = vld [vmem:[%s221 + $0x8] sm:$0xff]
        %v261 = vld [vmem:[%s221 + $0x10] sm:$0xff]
        %v262 = vld [vmem:[%s221 + $0x18] sm:$0xff]
        %v263 = vld [vmem:[%s221 + $0x20] sm:$0xff]
        %v264 = vld [vmem:[%s221 + $0x28] sm:$0xff]
        %v265 = vld [vmem:[%s221 + $0x30] sm:$0xff]
        %v266 = vld [vmem:[%s221 + $0x38] sm:$0xff]
        %v267 = vld [vmem:[%s2] sm:$0xff]
        %v268 = vld [vmem:[%s2 + $0x8] sm:$0xff]
        %v269 = vld [vmem:[%s2 + $0x10] sm:$0xff]
        %v270 = vld [vmem:[%s2 + $0x18] sm:$0xff]
        %272 = vset.pattern.permute.xlu0 0
        %273 = vperm.xlu0 %272, %v267
        %v274 = vpop.permute.xlu0 %273
        %277 = vset.pattern.permute.xlu0 0
        %278 = vperm.xlu0 %277, %v268
        %v279 = vpop.permute.xlu0 %278
        %282 = vset.pattern.permute.xlu0 0
        %283 = vperm.xlu0 %282, %v269
        %v284 = vpop.permute.xlu0 %283
        %287 = vset.pattern.permute.xlu0 0
        %288 = vperm.xlu0 %287, %v270
        %v289 = vpop.permute.xlu0 %288
        %v291 = vmul.f32 %v259, %v274
        %v292 = vmul.f32 %v260, %v274
        %v293 = vmul.f32 %v261, %v279
        %v294 = vmul.f32 %v262, %v279
        %v295 = vmul.f32 %v263, %v284
        %v296 = vmul.f32 %v264, %v284
        %v297 = vmul.f32 %v265, %v289
        %v298 = vmul.f32 %v266, %v289
        %v299 = vadd.f32 %v291, %v293
        %v300 = vadd.f32 %v299, %v295
        %v301 = vadd.f32 %v300, %v297
        %v302 = vrot.slane %v301, 4
        %v303 = vadd.f32 %v301, %v302
        %v304 = vrot.slane %v303, 2
        %v305 = vadd.f32 %v303, %v304
        %v306 = vrot.slane %v305, 1
        %v307 = vadd.f32 %v305, %v306
        %v308 = vadd.f32 %v292, %v294
        %v309 = vadd.f32 %v308, %v296
        %v310 = vadd.f32 %v309, %v298
        %v311 = vrot.slane %v310, 4
        %v312 = vadd.f32 %v310, %v311
        %v313 = vrot.slane %v312, 2
        %v314 = vadd.f32 %v312, %v313
        %v315 = vrot.slane %v314, 1
        %v316 = vadd.f32 %v314, %v315
        %s317 = sld [smem:[#allocation2]]
        %v318 = vstv %s317
        %v319 = vadd.f32 %v307, %v318
        %v320 = vadd.f32 %v316, %v318
        %v321 = vxor.u32 %v319, 2147483648
        %v322 = vxor.u32 %v320, 2147483648
        %v323 = vmul.f32 %v321, 1.442695
        %v324 = vpow.pop %v323
        %v325 = vmul.f32 %v322, 1.442695
        %v326 = vpow.pop %v325
        %v327 = vadd.f32 %v324, 1.0
        %v328 = vadd.f32 %v326, 1.0
        %v329 = vrcp.pop %v327
        %v330 = vmul.f32 %v327, %v329
        %v331 = vsub.f32 1.0, %v330
        %v332 = vmul.f32 %v329, %v331
        %v333 = vadd.f32 %v329, %v332
        %vm334 = vweird.f32 %v327
        %vm335 = vweird.f32 %v329
        %vm336 = vmor %vm334, %vm335
        %v337 = vsel %vm336, %v329, %v333
        %v338 = vand.u32 2147483647, %v327
        %vm339 = vcmp.eq.f32.partialorder %v338, 8.507059e+37
        %v340 = vand.u32 %v327, 2147483648
        %v341 = vor.u32 1.1754944e-38, %v340
        %v342 = vsel %vm339, %v341, %v337
        %v343 = vmul.f32 1.0, %v342
        %v344 = vrcp.pop %v328
        %v345 = vmul.f32 %v328, %v344
        %v346 = vsub.f32 1.0, %v345
        %v347 = vmul.f32 %v344, %v346
        %v348 = vadd.f32 %v344, %v347
        %vm349 = vweird.f32 %v328
        %vm350 = vweird.f32 %v344
        %vm351 = vmor %vm349, %vm350
        %v352 = vsel %vm351, %v344, %v348
        %v353 = vand.u32 2147483647, %v328
        %vm354 = vcmp.eq.f32.partialorder %v353, 8.507059e+37
        %v355 = vand.u32 %v328, 2147483648
        %v356 = vor.u32 1.1754944e-38, %v355
        %v357 = vsel %vm354, %v356, %v352
        %v358 = vmul.f32 1.0, %v357
        %v359 = vld [vmem:[%s257] sm:$0xff]
        %v360 = vld [vmem:[%s257 + $0x8] sm:$0xff]
        %v361 = vld [vmem:[%s257 + $0x10] sm:$0xff]
        %v362 = vld [vmem:[%s257 + $0x18] sm:$0xff]
        %364 = vset.pattern.permute.xlu0 0
        %365 = vperm.xlu0 %364, %v359
        %v366 = vpop.permute.xlu0 %365
        %369 = vset.pattern.permute.xlu0 0
        %370 = vperm.xlu0 %369, %v360
        %v371 = vpop.permute.xlu0 %370
        %374 = vset.pattern.permute.xlu0 0
        %375 = vperm.xlu0 %374, %v361
        %v376 = vpop.permute.xlu0 %375
        %379 = vset.pattern.permute.xlu0 0
        %380 = vperm.xlu0 %379, %v362
        %v381 = vpop.permute.xlu0 %380
        %v383 = vadd.f32 %v366, %v343
        %v384 = vadd.f32 %v366, %v358
        %v385 = vadd.f32 %v371, %v343
        %v386 = vadd.f32 %v371, %v358
        %v387 = vadd.f32 %v376, %v343
        %v388 = vadd.f32 %v376, %v358
        %v389 = vadd.f32 %v381, %v343
        %v390 = vadd.f32 %v381, %v358
        %v391 = vmul.f32 %v259, %v383
        %v392 = vmul.f32 %v260, %v384
        %v393 = vmul.f32 %v261, %v385
        %v394 = vmul.f32 %v262, %v386
        %v395 = vmul.f32 %v263, %v387
        %v396 = vmul.f32 %v264, %v388
        %v397 = vmul.f32 %v265, %v389
        %v398 = vmul.f32 %v266, %v390
        %399 = vst [vmem:[%s251] sm:$0xff] %v391
        %400 = vst [vmem:[%s251 + $0x8] sm:$0xff] %v392
        %401 = vst [vmem:[%s251 + $0x10] sm:$0xff] %v393
        %402 = vst [vmem:[%s251 + $0x18] sm:$0xff] %v394
        %403 = vst [vmem:[%s251 + $0x20] sm:$0xff] %v395
        %404 = vst [vmem:[%s251 + $0x28] sm:$0xff] %v396
        %405 = vst [vmem:[%s251 + $0x30] sm:$0xff] %v397
        %406 = vst [vmem:[%s251 + $0x38] sm:$0xff] %v398
        %s407 = sand.u32 %s140, 1
        %s408 = scalar_lea.sflag [#allocation5], %s407
        %s409 = sand.u32 %s140, 1
        %s410 = smul.addr %s409, 64
        %s411 = scalar_lea.vmem [#allocation6], %s410
        // Predicated region
        $region41: #{tpu_custom_call.1} parent=35 // pred_check
          %p412 = pneg %p150
        $region42: #{tpu_custom_call.1} parent=35 // pred_check_branch
          %414 = sbr.rel (%p412) target = $region44
        $region43: #{tpu_custom_call.1} parent=35 // pred_region
          %s415 = smul.u32 2, %s27
          %417 = vsyncadd %s408, 0
          %s418 = smul.addr %s26, 8
          %s419 = sadd.s32 %s415, %s418
          %s420 = smul.addr %s419, 8
          %s421 = scalar_lea.hbm %s4, %s420
          %s422 = sshll.u32 %s411, 4
          %s423 = int_to_ptr.vmem [resolvable:$true] %s422
          %s424 = sshll.u32 %s421, 4
          %s425 = int_to_ptr.hbm [resolvable:$true] %s424
          %430 = dma.vmem_to_hbm [thread:$0]  %s423, 1024, %s425, %s408, 256, 256, 16
        $region44: #{tpu_custom_call.1} parent=35 // pred_fallthru
          _
      $region36: #{tpu_custom_call.1} parent=5 // pred_fallthru
        _
      %p431 = scmp.le.s32.totalorder 2, %s17
      // Predicated region
      $region45: #{tpu_custom_call.1} parent=5 // pred_check
        %p432 = pneg %p431
      $region46: #{tpu_custom_call.1} parent=5 // pred_check_branch
        %434 = sbr.rel (%p432) target = $region48
      $region47: #{tpu_custom_call.1} parent=5 // pred_region
        %s435 = ssub.s32 %s17, 2
        // Predicated region
        $region49: #{tpu_custom_call.1} parent=47 // pred_check
          %p436 = pneg %p156
        $region50: #{tpu_custom_call.1} parent=47 // pred_check_branch
          %438 = sbr.rel (%p436) target = $region52
        $region51: #{tpu_custom_call.1} parent=47 // pred_region
          %s439 = sand.u32 %s141, 1
          %s440 = scalar_lea.sflag [#allocation5], %s439
          %s441 = sand.u32 %s141, 1
          %s442 = smul.addr %s441, 64
          %s443 = scalar_lea.vmem [#allocation6], %s442
          %445 = dma.done %s440, 1024
        $region52: #{tpu_custom_call.1} parent=47 // pred_fallthru
          _
      $region48: #{tpu_custom_call.1} parent=5 // pred_fallthru
        _
    $region6: #{tpu_custom_call.1} parent=1 // loop_footer
      %s21 = sadd.s32 1, %s17
    $region7: #{tpu_custom_call.1} parent=1 // loop_footer_branch
      %16 = sbr.rel target = $region3
    $region8: #{tpu_custom_call.1} parent=1 // loop_exit
      _
    %446 = vsyncpa [#allocation4], 1
    %s447 = scalar_lea.sflag [#allocation4], 1
    %448 = vsyncpa %s447, 1
    %449 = vsyncpa [#allocation5], 1
    %s450 = scalar_lea.sflag [#allocation5], 1
    %451 = vsyncpa %s450, 1

</llo_original>
